<compile_context>
chip_gen: v7x
topology: tpu7x:2x2x1
jax: 0.10.0
libtpu: 0.0.40
codegen_flags: <defaults>
</compile_context>

<pallas_src>
import functools

import jax
import jax.numpy as jnp
from jax.experimental import pallas as pl
from jax.experimental.pallas import tpu as pltpu


def _conv_decoder_kernel(x_ref, w_ref, o_ref, tail_ref, *, stride, num_shifts,
                         tile_frames, valid_frames, ragged, compute_dtype):
    """One (batch, frame-tile) grid step.

    x_ref:    (tile_frames, C)       input dtype as stored in HBM (cast here)
    w_ref:    (Kpad, C)              compute dtype; Kpad = num_shifts * stride
    o_ref:    (stride, tile_frames)  f32 transposed-folded output rows of this tile
    tail_ref: (stride, 128)          f32 rows spilling past the tile; same block for
                                     every t -> doubles as the carry across tiles.
    """
    t = pl.program_id(1)

    @pl.when(t == 0)
    def _init():
        tail_ref[...] = jnp.zeros_like(tail_ref)

    # Cast in VMEM (no extra HBM pass in the wrapper); zero the frames of the ragged
    # last tile BEFORE the matmul — their VMEM contents are unspecified.
    xv = x_ref[...].astype(compute_dtype)
    if ragged:
        fidx = t * tile_frames + jax.lax.broadcasted_iota(jnp.int32, xv.shape, 0)
        xv = jnp.where(fidx < valid_frames, xv, 0.0)

    if num_shifts > 1:
        lane = jax.lax.broadcasted_iota(jnp.int32, (stride, tile_frames), 1)
        lane_c = jax.lax.broadcasted_iota(jnp.int32, (stride, 128), 1)

    local = None
    carry_new = jnp.zeros((stride, 128), jnp.float32)
    for j in range(num_shifts):          # r = ceil(K/stride): small & static -> unrolled
        # Per-phase MXU matmul, lanes = time (lane-dense); f32 accumulation.
        part = jax.lax.dot_general(
            w_ref[j * stride:(j + 1) * stride, :], xv,
            dimension_numbers=(((1,), (1,)), ((), ())),
            preferred_element_type=jnp.float32)              # (stride, tile_frames)
        if j == 0:
            local = part
        else:
            # roll(x, j)[.., m] == x[.., m - j]; wrapped lanes (m < j) are exactly the
            # contributions that belong to the next tile -> route them to the carry.
            rolled = pltpu.roll(part, shift=j, axis=1)
            local = local + jnp.where(lane >= j, rolled, 0.0)
            carry_new = carry_new + jnp.where(lane_c < j, rolled[:, :128], 0.0)

    o_ref[...] = local                                        # single lane-dense store
    # RMW only the first 128 lanes with the overlap carried from the previous tile.
    o_ref[:, pl.ds(0, 128)] = local[:, :128] + tail_ref[...]
    tail_ref[...] = carry_new


def conv_decoder_forward(x, weight, *, kernel_size, stride, ilens,
                         tile_t=8192, compute_dtype=jnp.bfloat16):
    """Pallas ConvDecoder forward.

    Args:
      x:      [B, T, C] spectrum (C == channel); read as-is from HBM (no copy pass).
      weight: [C, K] ConvTranspose1d weight ((C, 1, K) squeezed).
      ilens:  int, desired output length; natural length is (T - 1) * stride + K.
      tile_t: target frames per kernel step (rounded to a multiple of 128).
      compute_dtype: MXU input dtype (bf16 default; pass jnp.float32 for full precision,
                     accumulation is f32 either way).
    Returns:
      (wav [B, ilens], ilens)
    """
    B, T, C = x.shape
    K = kernel_size
    assert weight.shape == (C, K), weight.shape

    r = -(-K // stride)                  # taps per output phase = ceil(K / stride)
    kpad = r * stride
    assert r - 1 <= 128, "kernel_size/stride ratio too large for the 128-lane carry"

    # Tiny-input guard only: keep the frame block within the array extent.  For any
    # realistic T (>= 128) the input is passed to the kernel untouched.
    if T < 128:
        x = jnp.pad(x, ((0, 0), (0, 128 - T), (0, 0)))
    T_eff = x.shape[1]

    tile_t = max(128, (int(tile_t) // 128) * 128)
    tile_frames = min(tile_t, (T_eff // 128) * 128)
    n_t = pl.cdiv(T_eff, tile_frames)
    rows = n_t * tile_frames
    ragged = (T_eff % tile_frames) != 0

    # Taps zero-padded to a multiple of stride (padded taps contribute exact zeros),
    # transposed to (Kpad, C); tiny, stays resident in VMEM across the grid.
    w_t = (jnp.zeros((kpad, C), jnp.float32)
           .at[:K, :].set(jnp.asarray(weight, jnp.float32).T)
           .astype(compute_dtype))

    kernel = functools.partial(
        _conv_decoder_kernel, stride=stride, num_shifts=r,
        tile_frames=tile_frames, valid_frames=T, ragged=ragged,
        compute_dtype=compute_dtype)

    cost = pl.CostEstimate(
        flops=2 * B * T_eff * C * kpad,
        transcendentals=0,
        bytes_accessed=(B * T_eff * C * x.dtype.itemsize
                        + kpad * C * w_t.dtype.itemsize
                        + B * stride * (rows + 128) * 4))

    folded, tail = pl.pallas_call(
        kernel,
        out_shape=(jax.ShapeDtypeStruct((B, stride, rows), jnp.float32),
                   jax.ShapeDtypeStruct((B, stride, 128), jnp.float32)),
        grid_spec=pltpu.PrefetchScalarGridSpec(
            num_scalar_prefetch=0,
            grid=(B, n_t),
            in_specs=[
                pl.BlockSpec((None, tile_frames, C), lambda b, t: (b, t, 0)),
                # Weight is tiny (Kpad x C); constant index map keeps it resident.
                pl.BlockSpec((kpad, C), lambda b, t: (0, 0)),
            ],
            out_specs=(
                pl.BlockSpec((None, stride, tile_frames), lambda b, t: (b, 0, t)),
                pl.BlockSpec((None, stride, 128), lambda b, t: (b, 0, 0)),
            ),
        ),
        compiler_params=pltpu.CompilerParams(
            dimension_semantics=("parallel", "arbitrary"),
            vmem_limit_bytes=48 * 1024 * 1024),
        cost_estimate=cost,
    )(x, w_t)

    # Glue: transposed-folded (B, stride, rows) -> natural waveform order.  The tail
    # rows are only needed when ilens extends past rows*stride (static check).
    main_len = rows * stride
    wav = jnp.transpose(folded, (0, 2, 1)).reshape(B, main_len)
    if ilens > main_len:
        tail_wav = jnp.transpose(tail, (0, 2, 1)).reshape(B, 128 * stride)
        wav = jnp.concatenate([wav, tail_wav], axis=1)
        if ilens > wav.shape[1]:
            wav = jnp.pad(wav, ((0, 0), (0, ilens - wav.shape[1])))
    wav = wav[:, :ilens]
    return wav, ilens


def _reference_forward(x, weight, stride, ilens):
    """Pure-JAX reference of ConvTranspose1d(C, 1, K, stride, bias=False)."""
    B, T, C = x.shape
    K = weight.shape[1]
    frames = jnp.einsum("btc,ck->btk", x, weight,
                        precision=jax.lax.Precision.HIGHEST)
    L = (T - 1) * stride + K
    out = jnp.zeros((B, max(L, ilens)), jnp.float32)
    for t in range(T):
        out = out.at[:, t * stride:t * stride + K].add(frames[:, t, :])
    return out[:, :ilens]


if __name__ == "__main__":
    channel, kernel_size, stride = 64, 16, 8
    key = jax.random.PRNGKey(0)

    def run_case(B, T, tile_t):
        kx, kw = jax.random.split(jax.random.fold_in(key, T))
        x = jax.random.normal(kx, (B, T, channel), dtype=jnp.float32)
        # Kaiming-uniform-like bound as in torch's default ConvTranspose1d init.
        bound = 1.0 / jnp.sqrt(jnp.float32(channel * kernel_size))
        weight = jax.random.uniform(kw, (channel, kernel_size), dtype=jnp.float32,
                                    minval=-bound, maxval=bound)
        ilens = (T - 1) * stride + kernel_size      # natural output length

        wav, out_len = conv_decoder_forward(
            x, weight, kernel_size=kernel_size, stride=stride, ilens=ilens,
            tile_t=tile_t)
        wav = jax.block_until_ready(wav)

        # Reference on bf16-rounded inputs (kernel feeds the MXU bf16, accumulates f32).
        xr = x.astype(jnp.bfloat16).astype(jnp.float32)
        wr = weight.astype(jnp.bfloat16).astype(jnp.float32)
        ref = _reference_forward(xr, wr, stride, ilens)

        assert wav.shape == (B, ilens), wav.shape
        assert out_len == ilens
        err = float(jnp.max(jnp.abs(wav - ref)))
        assert err < 1e-4, (T, err)

    run_case(B=2, T=16, tile_t=8192)    # tiny input: frame pad-to-128, single tile
    run_case(B=2, T=200, tile_t=128)    # multi-tile: ragged last tile + carry path
    run_case(B=2, T=256, tile_t=128)    # exact fill: tail rows come from 2nd output
    print("KERNEL_OK")
</pallas_src>

<mosaic_0001>
module attributes {stable_mosaic.version = 11 : i64} {
  func.func @_conv_decoder_kernel(%arg0: i32, %arg1: i32, %arg2: memref<1x128x64xf32, #tpu.memory_space<vmem>>, %arg3: memref<16x64xbf16, #tpu.memory_space<vmem>>, %arg4: memref<1x8x128xf32, #tpu.memory_space<vmem>>, %arg5: memref<1x8x128xf32, #tpu.memory_space<vmem>>) attributes {dimension_semantics = [#tpu.dimension_semantics<parallel>, #tpu.dimension_semantics<arbitrary>], iteration_bounds = array<i64: 2, 1>, scalar_prefetch = 0 : i64, scratch_operands = 0 : i64, tpu.core_type = #tpu.core_type<tc>, window_params = [{transform_indices = @transform_0, window_bounds = array<i64: 1, 128, 64>}, {pipeline_mode = #tpu.pipeline_mode<synchronous>, transform_indices = @transform_1, window_bounds = array<i64: 16, 64>}, {transform_indices = @transform_2, window_bounds = array<i64: 1, 8, 128>}, {transform_indices = @transform_3, window_bounds = array<i64: 1, 8, 128>}]} {
    %c0_i32 = arith.constant 0 : i32
    %0 = arith.cmpi eq, %arg1, %c0_i32 : i32
    %1 = arith.extui %0 : i1 to i32
    %c0_i32_0 = arith.constant 0 : i32
    %2 = arith.cmpi ne, %1, %c0_i32_0 : i32
    scf.if %2 {
      %cst_24 = arith.constant 0.000000e+00 : f32
      %36 = vector.broadcast %cst_24 : f32 to vector<8x128xf32>
      %c0_25 = arith.constant 0 : index
      %c0_26 = arith.constant 0 : index
      %c0_27 = arith.constant 0 : index
      %37 = vector.load %arg5[%c0_25, %c0_26, %c0_27] : memref<1x8x128xf32, #tpu.memory_space<vmem>>, vector<1x8x128xf32>
      %38 = vector.shape_cast %37 : vector<1x8x128xf32> to vector<8x128xf32>
      %39 = vector.shape_cast %36 : vector<8x128xf32> to vector<1x8x128xf32>
      tpu.vector_store %arg5[%c0_25, %c0_26, %c0_27], %39 {strides = array<i32>} : memref<1x8x128xf32, #tpu.memory_space<vmem>>, vector<1x8x128xf32>,
    } else {
    }
    %c0 = arith.constant 0 : index
    %c0_1 = arith.constant 0 : index
    %c0_2 = arith.constant 0 : index
    %3 = vector.load %arg2[%c0, %c0_1, %c0_2] : memref<1x128x64xf32, #tpu.memory_space<vmem>>, vector<1x128x64xf32>
    %4 = vector.shape_cast %3 : vector<1x128x64xf32> to vector<128x64xf32>
    %5 = arith.truncf %4 : vector<128x64xf32> to vector<128x64xbf16>
    %6 = tpu.iota {dimensions = array<i32: 1>} : vector<8x128xi32>
    %7 = tpu.iota {dimensions = array<i32: 1>} : vector<8x128xi32>
    %cst = arith.constant 0.000000e+00 : f32
    %8 = vector.broadcast %cst : f32 to vector<8x128xf32>
    %c0_3 = arith.constant 0 : index
    %c0_4 = arith.constant 0 : index
    %9 = vector.load %arg3[%c0_3, %c0_4] : memref<16x64xbf16, #tpu.memory_space<vmem>>, vector<8x64xbf16>
    %cst_5 = arith.constant dense<0.000000e+00> : vector<8x128xf32>
    %10 = tpu.matmul %9, %5, %cst_5 {dimension_numbers = #tpu.dot_dimension_numbers<[1], [1], [0], [0], [0, 0, 1, 0], [], []>} : vector<8x64xbf16>, vector<128x64xbf16>, vector<8x128xf32> -> vector<8x128xf32>
    %c8 = arith.constant 8 : index
    %c0_6 = arith.constant 0 : index
    %11 = vector.load %arg3[%c8, %c0_6] : memref<16x64xbf16, #tpu.memory_space<vmem>>, vector<8x64xbf16>
    %cst_7 = arith.constant dense<0.000000e+00> : vector<8x128xf32>
    %12 = tpu.matmul %11, %5, %cst_7 {dimension_numbers = #tpu.dot_dimension_numbers<[1], [1], [0], [0], [0, 0, 1, 0], [], []>} : vector<8x64xbf16>, vector<128x64xbf16>, vector<8x128xf32> -> vector<8x128xf32>
    %c1_i32 = arith.constant 1 : i32
    %13 = tpu.dynamic_rotate %12 by %c1_i32 dim 1 : vector<8x128xf32>, i32 -> vector<8x128xf32>
    %c1_i32_8 = arith.constant 1 : i32
    %14 = vector.broadcast %c1_i32_8 : i32 to vector<8x128xi32>
    %15 = arith.cmpi sge, %6, %14 : vector<8x128xi32>
    %cst_9 = arith.constant 0.000000e+00 : f32
    %16 = vector.broadcast %cst_9 : f32 to vector<8x128xf32>
    %17 = arith.select %15, %13, %16 : vector<8x128xi1>, vector<8x128xf32>
    %18 = arith.addf %10, %17 : vector<8x128xf32>
    %c1_i32_10 = arith.constant 1 : i32
    %19 = vector.broadcast %c1_i32_10 : i32 to vector<8x128xi32>
    %20 = arith.cmpi slt, %7, %19 : vector<8x128xi32>
    %cst_11 = arith.constant 0.000000e+00 : f32
    %21 = vector.broadcast %cst_11 : f32 to vector<8x128xf32>
    %22 = arith.select %20, %13, %21 : vector<8x128xi1>, vector<8x128xf32>
    %23 = arith.addf %8, %22 : vector<8x128xf32>
    %c0_12 = arith.constant 0 : index
    %c0_13 = arith.constant 0 : index
    %c0_14 = arith.constant 0 : index
    %24 = vector.load %arg4[%c0_12, %c0_13, %c0_14] : memref<1x8x128xf32, #tpu.memory_space<vmem>>, vector<1x8x128xf32>
    %25 = vector.shape_cast %24 : vector<1x8x128xf32> to vector<8x128xf32>
    %26 = vector.shape_cast %18 : vector<8x128xf32> to vector<1x8x128xf32>
    tpu.vector_store %arg4[%c0_12, %c0_13, %c0_14], %26 {strides = array<i32>} : memref<1x8x128xf32, #tpu.memory_space<vmem>>, vector<1x8x128xf32>,
    %c0_15 = arith.constant 0 : index
    %c0_16 = arith.constant 0 : index
    %c0_17 = arith.constant 0 : index
    %27 = vector.load %arg5[%c0_15, %c0_16, %c0_17] : memref<1x8x128xf32, #tpu.memory_space<vmem>>, vector<1x8x128xf32>
    %28 = vector.shape_cast %27 : vector<1x8x128xf32> to vector<8x128xf32>
    %29 = arith.addf %18, %28 : vector<8x128xf32>
    %c0_18 = arith.constant 0 : index
    %c0_19 = arith.constant 0 : index
    %c0_20 = arith.constant 0 : index
    %30 = vector.load %arg4[%c0_18, %c0_19, %c0_20] : memref<1x8x128xf32, #tpu.memory_space<vmem>>, vector<1x8x128xf32>
    %31 = vector.shape_cast %30 : vector<1x8x128xf32> to vector<8x128xf32>
    %32 = vector.shape_cast %29 : vector<8x128xf32> to vector<1x8x128xf32>
    tpu.vector_store %arg4[%c0_18, %c0_19, %c0_20], %32 {strides = array<i32>} : memref<1x8x128xf32, #tpu.memory_space<vmem>>, vector<1x8x128xf32>,
    %c0_21 = arith.constant 0 : index
    %c0_22 = arith.constant 0 : index
    %c0_23 = arith.constant 0 : index
    %33 = vector.load %arg5[%c0_21, %c0_22, %c0_23] : memref<1x8x128xf32, #tpu.memory_space<vmem>>, vector<1x8x128xf32>
    %34 = vector.shape_cast %33 : vector<1x8x128xf32> to vector<8x128xf32>
    %35 = vector.shape_cast %23 : vector<8x128xf32> to vector<1x8x128xf32>
    tpu.vector_store %arg5[%c0_21, %c0_22, %c0_23], %35 {strides = array<i32>} : memref<1x8x128xf32, #tpu.memory_space<vmem>>, vector<1x8x128xf32>,
    return
  }
  func.func @transform_0(%arg0: i32, %arg1: i32) -> (i32, i32, i32) {
    %c0_i32 = arith.constant 0 : i32
    %c0_i32_0 = arith.constant 0 : i32
    return %arg0, %arg1, %c0_i32 : i32, i32, i32
  }
  func.func @transform_1(%arg0: i32, %arg1: i32) -> (i32, i32) {
    %c0_i32 = arith.constant 0 : i32
    %c0_i32_0 = arith.constant 0 : i32
    %c0_i32_1 = arith.constant 0 : i32
    return %c0_i32, %c0_i32_0 : i32, i32
  }
  func.func @transform_2(%arg0: i32, %arg1: i32) -> (i32, i32, i32) {
    %c0_i32 = arith.constant 0 : i32
    %c0_i32_0 = arith.constant 0 : i32
    return %arg0, %c0_i32, %arg1 : i32, i32, i32
  }
  func.func @transform_3(%arg0: i32, %arg1: i32) -> (i32, i32, i32) {
    %c0_i32 = arith.constant 0 : i32
    %c0_i32_0 = arith.constant 0 : i32
    %c0_i32_1 = arith.constant 0 : i32
    return %arg0, %c0_i32, %c0_i32_0 : i32, i32, i32
  }
}

</mosaic_0001>

<llo_original>
// kernel: tpu_custom_call.1
$region0: #{tpu_custom_call.1}
  #allocation0 [shape = 'u32[]', space=smem, size = 0x4, offset = 0x4, fixed_abs, tag = 'smem constant byte address 0x4 - core index']
  #allocation1 [shape = 'u32[144,128]{1,0:T(1,128)}', space=vmem, size = 0x12000, scoped, tag = 'internal scratch']
  %s0 = inlined_call_operand.vmem [shape: f32[2,128,64], index: 0, kind: input, shape index: {}]
  %s1 = inlined_call_operand.vmem [shape: bf16[16,64], index: 1, kind: input, shape index: {}]
  %s2 = inlined_call_operand.hbm [shape: f32[2,8,128], index: 2, kind: output, shape index: {0}]
  %s3 = inlined_call_operand.hbm [shape: f32[2,8,128], index: 3, kind: output, shape index: {1}]
  %4 = xla_tuple %s2, %s3
  %s5 = sld [smem:[#allocation0]]
  $region53: #{tpu_custom_call.1} parent=0
    _
  %s7 = ssub.s32 1, %s5
  %s8 = scalar_select 0, %s7, %s5
  $region1: #{tpu_custom_call.1} parent=0
    #allocation2 [shape = 'u8[8192]{0}', space=vmem, size = 0x2000, scoped, tag = 'output window, operand 0']
    #allocation3 [shape = 's32[2]{0}', space=sflag, size = 0x8, scoped, tag = 'scoped memory for tpu_custom_call.1']
    #allocation4 [shape = 'u8[8192]{0}', space=vmem, size = 0x2000, scoped, tag = 'output window, operand 1']
    #allocation5 [shape = 's32[2]{0}', space=sflag, size = 0x8, scoped, tag = 'scoped memory for tpu_custom_call.1']
    %9 = vsyncpa [#allocation3], 0
    %s10 = scalar_lea.sflag [#allocation3], 1
    %11 = vsyncpa %s10, 0
    %12 = vsyncpa [#allocation5], 0
    %s13 = scalar_lea.sflag [#allocation5], 1
    %14 = vsyncpa %s13, 0
    loop: start=0, step=1, limit=4
    $region2: #{tpu_custom_call.1} parent=1 // loop_pre_header
      _
    $region3: #{tpu_custom_call.1} parent=1 // loop_header
      %s16 = sphi 0, %s20
      %p17 = scmp.ge.s32.totalorder %s16, 4
      %s23 = sphi 0, %s35
      %s24 = sphi 0, %s31
      %s25 = sphi 0, %s23
      %s26 = sphi 0, %s24
      %s27 = sphi 0, %s25
      %s28 = sphi 0, %s26
      %s40 = sphi 0, %s42
      %s43 = sphi 0, %s40
      %s44 = sphi 0, %s43
      %s60 = sphi 0, %s44
      %s64 = sphi 0, %s64
      %s66 = sphi 0, %s64
      %s67 = sphi 0, %s66
      %s81 = sphi 0, %s67
      %s89 = sphi 0, %s91
      %s92 = sphi 0, %s89
      %s93 = sphi 0, %s92
      %s109 = sphi 0, %s93
      %s115 = sphi 0, %s117
      %s118 = sphi 0, %s115
      %s119 = sphi 0, %s118
      %s135 = sphi 0, %s119
    $region4: #{tpu_custom_call.1} parent=1 // loop_header_branch
      %19 = sbr.rel (%p17) target = $region8
    $region5: #{tpu_custom_call.1} parent=1 // loop_body
      %s21 = ssub.s32 %s16, 1
      %s22 = ssub.s32 %s16, 2
      %s29 = sadd.s32 1, %s24
      %p30 = scmp.ge.s32.totalorder %s29, 1
      %s31 = scalar_select %p30, 0, %s29
      %s32 = sadd.s32 1, %s23
      %s33 = scalar_select %p30, %s32, %s23
      %p34 = scmp.ge.s32.totalorder %s33, 2
      %s35 = scalar_select %p34, 0, %s33
      %s36 = ssub.s32 %s23, %s35
      %s37 = ssub.s32 %s24, %s31
      %s38 = sor.u32 %s36, %s37
      %p39 = scmp.eq.s32.totalorder %s38, 0
      %s41 = sadd.s32 %s40, 1
      %s42 = scalar_select %p39, %s40, %s41
      %p45 = pneg %p39
      %p46 = scmp.eq.s32.totalorder %s16, 1
      %p47 = por %p45, %p46
      %p48 = scmp.ne.s32.totalorder %s40, %s43
      %p49 = scmp.eq.s32.totalorder %s16, 0
      %p50 = por %p48, %p49
      %p51 = scmp.ne.s32.totalorder %s40, %s43
      %p52 = scmp.eq.s32.totalorder %s21, 1
      %p53 = por %p51, %p52
      %p54 = scmp.ne.s32.totalorder %s43, %s44
      %p55 = scmp.eq.s32.totalorder %s21, 0
      %p56 = por %p54, %p55
      %p57 = scmp.ne.s32.totalorder %s43, %s44
      %p58 = scmp.eq.s32.totalorder %s22, 1
      %p59 = por %p57, %p58
      %p61 = scmp.ne.s32.totalorder %s44, %s60
      %p62 = scmp.eq.s32.totalorder %s22, 0
      %p63 = por %p61, %p62
      %s65 = sadd.s32 %s64, 1
      %p68 = scmp.eq.s32.totalorder %s16, 1
      %p69 = scmp.ne.s32.totalorder %s64, %s66
      %p70 = scmp.eq.s32.totalorder %s16, 0
      %p71 = por %p69, %p70
      %p72 = scmp.ne.s32.totalorder %s64, %s66
      %p73 = scmp.eq.s32.totalorder %s21, 1
      %p74 = por %p72, %p73
      %p75 = scmp.ne.s32.totalorder %s66, %s67
      %p76 = scmp.eq.s32.totalorder %s21, 0
      %p77 = por %p75, %p76
      %p78 = scmp.ne.s32.totalorder %s66, %s67
      %p79 = scmp.eq.s32.totalorder %s22, 1
      %p80 = por %p78, %p79
      %p82 = scmp.ne.s32.totalorder %s67, %s81
      %p83 = scmp.eq.s32.totalorder %s22, 0
      %p84 = por %p82, %p83
      %s85 = ssub.s32 %s23, %s35
      %s86 = ssub.s32 %s24, %s31
      %s87 = sor.u32 %s85, %s86
      %p88 = scmp.eq.s32.totalorder %s87, 0
      %s90 = sadd.s32 %s89, 1
      %s91 = scalar_select %p88, %s89, %s90
      %p94 = pneg %p88
      %p95 = scmp.eq.s32.totalorder %s16, 1
      %p96 = por %p94, %p95
      %p97 = scmp.ne.s32.totalorder %s89, %s92
      %p98 = scmp.eq.s32.totalorder %s16, 0
      %p99 = por %p97, %p98
      %p100 = scmp.ne.s32.totalorder %s89, %s92
      %p101 = scmp.eq.s32.totalorder %s21, 1
      %p102 = por %p100, %p101
      %p103 = scmp.ne.s32.totalorder %s92, %s93
      %p104 = scmp.eq.s32.totalorder %s21, 0
      %p105 = por %p103, %p104
      %p106 = scmp.ne.s32.totalorder %s92, %s93
      %p107 = scmp.eq.s32.totalorder %s22, 1
      %p108 = por %p106, %p107
      %p110 = scmp.ne.s32.totalorder %s93, %s109
      %p111 = scmp.eq.s32.totalorder %s22, 0
      %p112 = por %p110, %p111
      %s113 = ssub.s32 %s23, %s35
      %p114 = scmp.eq.s32.totalorder %s113, 0
      %s116 = sadd.s32 %s115, 1
      %s117 = scalar_select %p114, %s115, %s116
      %p120 = pneg %p114
      %p121 = scmp.eq.s32.totalorder %s16, 1
      %p122 = por %p120, %p121
      %p123 = scmp.ne.s32.totalorder %s115, %s118
      %p124 = scmp.eq.s32.totalorder %s16, 0
      %p125 = por %p123, %p124
      %p126 = scmp.ne.s32.totalorder %s115, %s118
      %p127 = scmp.eq.s32.totalorder %s21, 1
      %p128 = por %p126, %p127
      %p129 = scmp.ne.s32.totalorder %s118, %s119
      %p130 = scmp.eq.s32.totalorder %s21, 0
      %p131 = por %p129, %p130
      %p132 = scmp.ne.s32.totalorder %s118, %s119
      %p133 = scmp.eq.s32.totalorder %s22, 1
      %p134 = por %p132, %p133
      %p136 = scmp.ne.s32.totalorder %s119, %s135
      %p137 = scmp.eq.s32.totalorder %s22, 0
      %p138 = por %p136, %p137
      %p139 = scmp.le.s32.totalorder 1, %s16
      %p140 = scmp.lt.s32.totalorder %s16, 3
      %p141 = pnand %p139, %p140
      %p142 = pneg %p141
      // Predicated region
      $region9: #{tpu_custom_call.1} parent=5 // pred_check
        _
      $region10: #{tpu_custom_call.1} parent=5 // pred_check_branch
        %144 = sbr.rel (%p141) target = $region12
      $region11: #{tpu_custom_call.1} parent=5 // pred_region
        %s145 = ssub.s32 %s16, 1
        // Predicated region
        $region13: #{tpu_custom_call.1} parent=11 // pred_check
          %p146 = pneg %p77
        $region14: #{tpu_custom_call.1} parent=11 // pred_check_branch
          %148 = sbr.rel (%p146) target = $region16
        $region15: #{tpu_custom_call.1} parent=11 // pred_region
          _
        $region16: #{tpu_custom_call.1} parent=11 // pred_fallthru
          _
      $region12: #{tpu_custom_call.1} parent=5 // pred_fallthru
        _
      %p149 = scmp.lt.s32.totalorder %s16, 2
      // Predicated region
      $region17: #{tpu_custom_call.1} parent=5 // pred_check
        %p150 = pneg %p149
      $region18: #{tpu_custom_call.1} parent=5 // pred_check_branch
        %152 = sbr.rel (%p150) target = $region20
      $region19: #{tpu_custom_call.1} parent=5 // pred_region
        // Predicated region
        $region21: #{tpu_custom_call.1} parent=19 // pred_check
          %p153 = pneg %p50
        $region22: #{tpu_custom_call.1} parent=19 // pred_check_branch
          %155 = sbr.rel (%p153) target = $region24
        $region23: #{tpu_custom_call.1} parent=19 // pred_region
          %s156 = smul.u32 16, %s24
          %p157 = scmp.lt.s32.totalorder %s23, 1
          %s158 = scalar_select %p157, %s23, 1
          %p159 = scmp.lt.s32.totalorder %s156, 15
          %s160 = scalar_select %p159, %s156, 15
          %s161 = smul.addr %s158, 16
          %s162 = sadd.s32 %s160, %s161
          %s163 = smul.addr %s162, 8
          %s164 = scalar_lea.vmem %s0, %s163
          %s165 = smul.u32 16, %s24
        $region24: #{tpu_custom_call.1} parent=19 // pred_fallthru
          _
      $region20: #{tpu_custom_call.1} parent=5 // pred_fallthru
        _
      %p166 = scmp.le.s32.totalorder 1, %s16
      %p167 = scmp.lt.s32.totalorder %s16, 3
      %p168 = pnand %p166, %p167
      %p169 = pneg %p168
      // Predicated region
      $region25: #{tpu_custom_call.1} parent=5 // pred_check
        _
      $region26: #{tpu_custom_call.1} parent=5 // pred_check_branch
        %171 = sbr.rel (%p168) target = $region28
      $region27: #{tpu_custom_call.1} parent=5 // pred_region
        %s172 = ssub.s32 %s16, 1
        %s173 = smul.u32 16, %s26
        %p174 = scmp.lt.s32.totalorder %s25, 1
        %s175 = scalar_select %p174, %s25, 1
        %p176 = scmp.lt.s32.totalorder %s173, 15
        %s177 = scalar_select %p176, %s173, 15
        %s178 = smul.addr %s175, 16
        %s179 = sadd.s32 %s177, %s178
        %s180 = smul.addr %s179, 8
        %s181 = scalar_lea.vmem %s0, %s180
        %p182 = pneg %p56
        %p183 = pneg %p53
        %p184 = pneg %p77
        %p185 = pneg %p74
        %p186 = pneg %p105
        %p187 = pneg %p102
        %s188 = sand.u32 %s92, 1
        %s189 = scalar_lea.sflag [#allocation3], %s188
        %s190 = sand.u32 %s92, 1
        %s191 = smul.addr %s190, 8
        %s192 = scalar_lea.vmem [#allocation2], %s191
        %p193 = pneg %p131
        %p194 = pneg %p128
        %s195 = sand.u32 %s118, 1
        %s196 = scalar_lea.sflag [#allocation5], %s195
        %s197 = sand.u32 %s118, 1
        %s198 = smul.addr %s197, 8
        %s199 = scalar_lea.vmem [#allocation4], %s198
        %s200 = smul.u32 16, %s26
        %p201 = scmp.lt.s32.totalorder %s25, 1
        %s202 = scalar_select %p201, %s25, 1
        %p203 = scmp.lt.s32.totalorder %s200, 15
        %s204 = scalar_select %p203, %s200, 15
        %s205 = smul.addr %s202, 16
        %s206 = sadd.s32 %s204, %s205
        %s207 = smul.addr %s206, 8
        %s208 = scalar_lea.vmem %s0, %s207
        %s209 = smul.u32 16, %s26
        %p211 = scmp.eq.s32.totalorder %s26, 0
        // Predicated region
        $region29: #{tpu_custom_call.1} parent=27 // pred_check
          %p212 = pneg %p211
        $region30: #{tpu_custom_call.1} parent=27 // pred_check_branch
          %214 = sbr.rel (%p212) target = $region32
        $region31: #{tpu_custom_call.1} parent=27 // pred_region
          %215 = vst [vmem:[%s199] sm:$0xff] 0.0
        $region32: #{tpu_custom_call.1} parent=27 // pred_fallthru
          _
        %v216 = vld [vmem:[%s208] sm:$0xff]
        %v217 = vld [vmem:[%s208 + $0x8] sm:$0xff]
        %v218 = vld [vmem:[%s208 + $0x10] sm:$0xff]
        %v219 = vld [vmem:[%s208 + $0x18] sm:$0xff]
        %v220 = vld [vmem:[%s208 + $0x20] sm:$0xff]
        %v221 = vld [vmem:[%s208 + $0x28] sm:$0xff]
        %v222 = vld [vmem:[%s208 + $0x30] sm:$0xff]
        %v223 = vld [vmem:[%s208 + $0x38] sm:$0xff]
        %v224 = vld [vmem:[%s208 + $0x40] sm:$0xff]
        %v225 = vld [vmem:[%s208 + $0x48] sm:$0xff]
        %v226 = vld [vmem:[%s208 + $0x50] sm:$0xff]
        %v227 = vld [vmem:[%s208 + $0x58] sm:$0xff]
        %v228 = vld [vmem:[%s208 + $0x60] sm:$0xff]
        %v229 = vld [vmem:[%s208 + $0x68] sm:$0xff]
        %v230 = vld [vmem:[%s208 + $0x70] sm:$0xff]
        %v231 = vld [vmem:[%s208 + $0x78] sm:$0xff]
        %v232 = vpack.c.bf16 %v217, %v216
        %v233 = vpack.c.bf16 %v219, %v218
        %v234 = vpack.c.bf16 %v221, %v220
        %v235 = vpack.c.bf16 %v223, %v222
        %v236 = vpack.c.bf16 %v225, %v224
        %v237 = vpack.c.bf16 %v227, %v226
        %v238 = vpack.c.bf16 %v229, %v228
        %v239 = vpack.c.bf16 %v231, %v230
        %v240 = vlaneseq
        %v241 = vand.u32 %v240, 127
        %v242 = vld [vmem:[%s1] sm:$0xf]
        %v243 = vld [vmem:[%s1 + $0x4] sm:$0xf]
        %vm244 = vcmask 523264
        %v246 = vsel %vm244, %v243, 0
        %v249 = vsel %vm244, %v232, 0
        %v252 = vsel %vm244, %v233, 0
        %v255 = vsel %vm244, %v234, 0
        %v258 = vsel %vm244, %v235, 0
        %v261 = vsel %vm244, %v236, 0
        %v264 = vsel %vm244, %v237, 0
        %v267 = vsel %vm244, %v238, 0
        %v270 = vsel %vm244, %v239, 0
        %272 = vmatprep.subr.bf16.mxu0 0
        %273 = vmatpush1.bf16.xpose.msra.mxu0 %v249
        %274 = vmatprep.subr.bf16.mxu0 0
        %275 = vmatpush1.bf16.xpose.msra.mxu0 %v252
        %276 = vmatprep.subr.bf16.mxu0 0
        %277 = vmatpush1.bf16.xpose.msra.mxu0 %v255
        %278 = vmatprep.subr.bf16.mxu0 0
        %279 = vmatpush1.bf16.xpose.msra.mxu0 %v258
        %280 = vmatprep.subr.bf16.mxu0 0
        %281 = vmatpush1.bf16.xpose.msra.mxu0 %v261
        %282 = vmatprep.subr.bf16.mxu0 0
        %283 = vmatpush1.bf16.xpose.msra.mxu0 %v264
        %284 = vmatprep.subr.bf16.mxu0 0
        %285 = vmatpush1.bf16.xpose.msra.mxu0 %v267
        %286 = vmatprep.subr.bf16.mxu0 0
        %287 = vmatpush1.bf16.xpose.msra.mxu0 %v270
        %288 = vmatprep.subr.bf16.mxu0 0
        %289 = vmatpush1.bf16.xpose.msra.mxu0 0
        %290 = vmatprep.subr.bf16.mxu0 0
        %291 = vmatpush1.bf16.xpose.msra.mxu0 0
        %292 = vmatprep.subr.bf16.mxu0 0
        %293 = vmatpush1.bf16.xpose.msra.mxu0 0
        %294 = vmatprep.subr.bf16.mxu0 0
        %295 = vmatpush1.bf16.xpose.msra.mxu0 0
        %296 = vmatprep.subr.bf16.mxu0 0
        %297 = vmatpush1.bf16.xpose.msra.mxu0 0
        %298 = vmatprep.subr.bf16.mxu0 0
        %299 = vmatpush1.bf16.xpose.msra.mxu0 0
        %300 = vmatprep.subr.bf16.mxu0 0
        %301 = vmatpush1.bf16.xpose.msra.mxu0 0
        %302 = vmatprep.subr.bf16.mxu0 0
        %303 = vmatpush1.bf16.xpose.msra.mxu0 0
        %304 = vmatprep.mubr.bf16.mxu0 0
        %305 = vmatmul.mubr.bf16.gmra.mrb[0].mxu0 %v246
        %v306 = vpop.f32.mrb[0].mxu0
        %v307 = vadd.f32 0.0, %v306
        %v308 = vpop.f32.mrb[0].mxu0
        %v309 = vpop.f32.mrb[0].mxu0
        %v310 = vpop.f32.mrb[0].mxu0
        %311 = vdwg.mxu0
        %312 = vrot.lane.b32.xlu0 %v307, 1
        %v313 = vpop.permute.xlu0 %312
        %vm314 = vcmp.ge.s32.totalorder %v241, 1
        %v315 = vsel %vm314, %v313, 0.0
        %v317 = vsel %vm244, %v242, 0
        %319 = vmatprep.subr.bf16.mxu0 0
        %320 = vmatpush1.bf16.xpose.msra.mxu0 %v249
        %321 = vmatprep.subr.bf16.mxu0 0
        %322 = vmatpush1.bf16.xpose.msra.mxu0 %v252
        %323 = vmatprep.subr.bf16.mxu0 0
        %324 = vmatpush1.bf16.xpose.msra.mxu0 %v255
        %325 = vmatprep.subr.bf16.mxu0 0
        %326 = vmatpush1.bf16.xpose.msra.mxu0 %v258
        %327 = vmatprep.subr.bf16.mxu0 0
        %328 = vmatpush1.bf16.xpose.msra.mxu0 %v261
        %329 = vmatprep.subr.bf16.mxu0 0
        %330 = vmatpush1.bf16.xpose.msra.mxu0 %v264
        %331 = vmatprep.subr.bf16.mxu0 0
        %332 = vmatpush1.bf16.xpose.msra.mxu0 %v267
        %333 = vmatprep.subr.bf16.mxu0 0
        %334 = vmatpush1.bf16.xpose.msra.mxu0 %v270
        %335 = vmatprep.subr.bf16.mxu0 0
        %336 = vmatpush1.bf16.xpose.msra.mxu0 0
        %337 = vmatprep.subr.bf16.mxu0 0
        %338 = vmatpush1.bf16.xpose.msra.mxu0 0
        %339 = vmatprep.subr.bf16.mxu0 0
        %340 = vmatpush1.bf16.xpose.msra.mxu0 0
        %341 = vmatprep.subr.bf16.mxu0 0
        %342 = vmatpush1.bf16.xpose.msra.mxu0 0
        %343 = vmatprep.subr.bf16.mxu0 0
        %344 = vmatpush1.bf16.xpose.msra.mxu0 0
        %345 = vmatprep.subr.bf16.mxu0 0
        %346 = vmatpush1.bf16.xpose.msra.mxu0 0
        %347 = vmatprep.subr.bf16.mxu0 0
        %348 = vmatpush1.bf16.xpose.msra.mxu0 0
        %349 = vmatprep.subr.bf16.mxu0 0
        %350 = vmatpush1.bf16.xpose.msra.mxu0 0
        %351 = vmatprep.mubr.bf16.mxu0 0
        %352 = vmatmul.mubr.bf16.gmra.mrb[0].mxu0 %v317
        %v353 = vpop.f32.mrb[0].mxu0
        %v354 = vadd.f32 %v315, %v353
        %v355 = vpop.f32.mrb[0].mxu0
        %v356 = vpop.f32.mrb[0].mxu0
        %v357 = vpop.f32.mrb[0].mxu0
        %358 = vdwg.mxu0
        %vm359 = vcmp.lt.s32.totalorder %v241, 1
        %v360 = vsel %vm359, %v313, 0.0
        %v361 = vadd.f32 %v360, 0.0
        %362 = vst [vmem:[%s192] sm:$0xff] %v354
        %v363 = vld [vmem:[%s199] sm:$0xff]
        %v364 = vadd.f32 %v354, %v363
        %365 = vst [vmem:[%s192] sm:$0xff] %v364
        %366 = vst [vmem:[%s199] sm:$0xff] %v361
        %s367 = sand.u32 %s92, 1
        %s368 = scalar_lea.sflag [#allocation3], %s367
        %s369 = sand.u32 %s92, 1
        %s370 = smul.addr %s369, 8
        %s371 = scalar_lea.vmem [#allocation2], %s370
        %s372 = sand.u32 %s118, 1
        %s373 = scalar_lea.sflag [#allocation5], %s372
        %s374 = sand.u32 %s118, 1
        %s375 = smul.addr %s374, 8
        %s376 = scalar_lea.vmem [#allocation4], %s375
        // Predicated region
        $region33: #{tpu_custom_call.1} parent=27 // pred_check
          %p377 = pneg %p102
        $region34: #{tpu_custom_call.1} parent=27 // pred_check_branch
          %379 = sbr.rel (%p377) target = $region36
        $region35: #{tpu_custom_call.1} parent=27 // pred_region
          %s381 = ssub.s32 128, 128
          %382 = vsyncadd %s368, %s381
          %s383 = sadd.s32 %s26, %s25
          %s384 = smul.addr %s383, 128
          %s385 = scalar_lea.hbm %s2, %s384
          %s387 = sshll.u32 %s371, 4
          %s388 = int_to_ptr.vmem [resolvable:$true] %s387
          %390 = dma.vmem_to_hbm [thread:$0]  %s388, 128, %s385, %s368
        $region36: #{tpu_custom_call.1} parent=27 // pred_fallthru
          _
        // Predicated region
        $region37: #{tpu_custom_call.1} parent=27 // pred_check
          %p391 = pneg %p128
        $region38: #{tpu_custom_call.1} parent=27 // pred_check_branch
          %393 = sbr.rel (%p391) target = $region40
        $region39: #{tpu_custom_call.1} parent=27 // pred_region
          %s395 = ssub.s32 128, 128
          %396 = vsyncadd %s373, %s395
          %s397 = smul.addr %s25, 128
          %s398 = scalar_lea.hbm %s3, %s397
          %s400 = sshll.u32 %s376, 4
          %s401 = int_to_ptr.vmem [resolvable:$true] %s400
          %403 = dma.vmem_to_hbm [thread:$0]  %s401, 128, %s398, %s373
        $region40: #{tpu_custom_call.1} parent=27 // pred_fallthru
          _
      $region28: #{tpu_custom_call.1} parent=5 // pred_fallthru
        _
      %p404 = scmp.le.s32.totalorder 2, %s16
      // Predicated region
      $region41: #{tpu_custom_call.1} parent=5 // pred_check
        %p405 = pneg %p404
      $region42: #{tpu_custom_call.1} parent=5 // pred_check_branch
        %407 = sbr.rel (%p405) target = $region44
      $region43: #{tpu_custom_call.1} parent=5 // pred_region
        %s408 = ssub.s32 %s16, 2
        // Predicated region
        $region45: #{tpu_custom_call.1} parent=43 // pred_check
          %p409 = pneg %p108
        $region46: #{tpu_custom_call.1} parent=43 // pred_check_branch
          %411 = sbr.rel (%p409) target = $region48
        $region47: #{tpu_custom_call.1} parent=43 // pred_region
          %s412 = sand.u32 %s93, 1
          %s413 = scalar_lea.sflag [#allocation3], %s412
          %s414 = sand.u32 %s93, 1
          %s415 = smul.addr %s414, 8
          %s416 = scalar_lea.vmem [#allocation2], %s415
          %417 = dma.done %s413, 128
        $region48: #{tpu_custom_call.1} parent=43 // pred_fallthru
          _
        // Predicated region
        $region49: #{tpu_custom_call.1} parent=43 // pred_check
          %p418 = pneg %p134
        $region50: #{tpu_custom_call.1} parent=43 // pred_check_branch
          %420 = sbr.rel (%p418) target = $region52
        $region51: #{tpu_custom_call.1} parent=43 // pred_region
          %s421 = sand.u32 %s119, 1
          %s422 = scalar_lea.sflag [#allocation5], %s421
          %s423 = sand.u32 %s119, 1
          %s424 = smul.addr %s423, 8
          %s425 = scalar_lea.vmem [#allocation4], %s424
          %426 = dma.done %s422, 128
        $region52: #{tpu_custom_call.1} parent=43 // pred_fallthru
          _
      $region44: #{tpu_custom_call.1} parent=5 // pred_fallthru
        _
    $region6: #{tpu_custom_call.1} parent=1 // loop_footer
      %s20 = sadd.s32 1, %s16
    $region7: #{tpu_custom_call.1} parent=1 // loop_footer_branch
      %15 = sbr.rel target = $region3
    $region8: #{tpu_custom_call.1} parent=1 // loop_exit
      _
    %427 = vsyncpa [#allocation3], 1
    %s428 = scalar_lea.sflag [#allocation3], 1
    %429 = vsyncpa %s428, 1
    %430 = vsyncpa [#allocation5], 1
    %s431 = scalar_lea.sflag [#allocation5], 1
    %432 = vsyncpa %s431, 1

</llo_original>
